<compile_context>
chip_gen: v6e
topology: v6e:2x2x1
jax: 0.10.0
libtpu: 0.0.40
codegen_flags: <defaults>
</compile_context>

<pallas_src>
import functools

import jax
import jax.numpy as jnp
from jax.experimental import pallas as pl
from jax.experimental.pallas import tpu as pltpu

F_IN = 25     # fc1 in_features
F_HID = 75    # fc1 out_features / fc2 in_features
F_OUT = 25    # fc2 out_features
LANE = 128    # lane-dense padding target for the hidden dim


def _round_up(n, m):
    return ((n + m - 1) // m) * m


def _mlp_kernel(x_ref, w1_ref, b1_ref, w2_ref, b2_ref, o_ref):
    # Layer 1: (tb, 25) f32 @ (25, 128) f32 -> f32 acc; bias + tanh in f32.
    h = jnp.dot(x_ref[...], w1_ref[...], preferred_element_type=jnp.float32)
    h = jnp.tanh(h + b1_ref[...])
    # Padded hidden cols (75:128) are tanh(0 + 0) = 0 and the matching rows
    # of the padded W2 are zero, so they contribute nothing below.
    # Layer 2: (tb, 128) f32 @ (128, 25) f32 -> f32 acc; bias + tanh in f32.
    y = jnp.dot(h, w2_ref[...], preferred_element_type=jnp.float32)
    o_ref[...] = jnp.tanh(y + b2_ref[...]).astype(o_ref.dtype)


def pad_params(w1, b1, w2, b2):
    """One-time prep: zero-pad the hidden dim (75 -> 128 lanes).

    Called once at init time, outside the jitted forward, so no per-call
    pad/cast XLA ops are added around the microsecond-scale kernel.
    w1: (25, 75), b1: (1, 75), w2: (75, 25), b2: (1, 25)  ->  padded f32.
    """
    f32 = jnp.float32
    w1p = jnp.zeros((F_IN, LANE), f32).at[:, :F_HID].set(w1.astype(f32))
    b1p = jnp.zeros((1, LANE), f32).at[:, :F_HID].set(b1.astype(f32))
    w2p = jnp.zeros((LANE, F_OUT), f32).at[:F_HID, :].set(w2.astype(f32))
    b2p = b2.astype(f32).reshape(1, F_OUT)
    return w1p, b1p, w2p, b2p


def net_forward(x, w1p, b1p, w2p, b2p, *, tile_b=4096):
    """Forward pass of Net.

    x: (B, 25) f32; w1p: (25, 128); b1p: (1, 128); w2p: (128, 25);
    b2p: (1, 25) -- the pre-padded params from `pad_params`.
    Returns (B, 25) f32.
    """
    B = x.shape[0]
    x = x.astype(jnp.float32)  # no-op if already f32

    # Batch tile: multiple of 8 sublanes, never larger than (rounded-up) B.
    tb = min(tile_b, _round_up(B, 8))
    grid = (pl.cdiv(B, tb),)   # ragged last block handled by Pallas

    return pl.pallas_call(
        _mlp_kernel,
        out_shape=jax.ShapeDtypeStruct((B, F_OUT), jnp.float32),
        grid_spec=pltpu.PrefetchScalarGridSpec(
            num_scalar_prefetch=0,
            grid=grid,
            in_specs=[
                # x: pipelined batch tile (25 == full trailing dim -> legal).
                pl.BlockSpec((tb, F_IN), lambda i: (i, 0)),
                # Weights / biases: resident in VMEM across all grid steps.
                pl.BlockSpec((F_IN, LANE), lambda i: (0, 0)),
                pl.BlockSpec((1, LANE), lambda i: (0, 0)),
                pl.BlockSpec((LANE, F_OUT), lambda i: (0, 0)),
                pl.BlockSpec((1, F_OUT), lambda i: (0, 0)),
            ],
            # Real-width output: (tb, 25) f32, no padded slab, no post-slice.
            out_specs=pl.BlockSpec((tb, F_OUT), lambda i: (i, 0)),
        ),
        compiler_params=pltpu.CompilerParams(
            # Independent batch tiles -> shard grid across TCs on v7x.
            dimension_semantics=("parallel",),
        ),
    )(x, w1p, b1p, w2p, b2p)


def init_params(key):
    """Deterministic init mirroring PyTorch's default Linear init:
    U(-1/sqrt(fan_in), 1/sqrt(fan_in)). Weights stored as (in, out)."""
    k1, k2, k3, k4 = jax.random.split(key, 4)
    bound1 = 1.0 / jnp.sqrt(25.0)
    bound2 = 1.0 / jnp.sqrt(75.0)
    w1 = jax.random.uniform(k1, (F_IN, F_HID), jnp.float32, -bound1, bound1)
    b1 = jax.random.uniform(k2, (1, F_HID), jnp.float32, -bound1, bound1)
    w2 = jax.random.uniform(k3, (F_HID, F_OUT), jnp.float32, -bound2, bound2)
    b2 = jax.random.uniform(k4, (1, F_OUT), jnp.float32, -bound2, bound2)
    return w1, b1, w2, b2


def _ref_forward_f32(x, w1, b1, w2, b2):
    """Pure-JAX f32 reference (PyTorch-equivalent forward)."""
    return jnp.tanh(jnp.tanh(x @ w1 + b1) @ w2 + b2)


if __name__ == "__main__":
    key = jax.random.PRNGKey(0)
    kx, kx2, kp = jax.random.split(key, 3)
    w1, b1, w2, b2 = init_params(kp)

    # One-time padding/cast of the params (kept outside the jitted forward).
    w1p, b1p, w2p, b2p = pad_params(w1, b1, w2, b2)

    fwd = jax.jit(functools.partial(net_forward, tile_b=512))

    # Small batch: single tile, grid == 1.
    x_small = jax.random.normal(kx, (8, F_IN), dtype=jnp.float32)
    out_small = jax.block_until_ready(fwd(x_small, w1p, b1p, w2p, b2p))
    assert out_small.shape == (8, F_OUT)

    # Larger, non-tile-divisible batch: exercises grid > 1 + ragged last block.
    x_big = jax.random.normal(kx2, (1203, F_IN), dtype=jnp.float32)
    out_big = jax.block_until_ready(fwd(x_big, w1p, b1p, w2p, b2p))
    assert out_big.shape == (1203, F_OUT)

    for x_, out_ in ((x_small, out_small), (x_big, out_big)):
        ref = _ref_forward_f32(x_, w1, b1, w2, b2)
        assert jnp.all(jnp.isfinite(out_))
        # f32 kernel vs f32 XLA reference; slack only for MXU pass rounding.
        assert jnp.allclose(out_, ref, atol=2e-2, rtol=2e-2)

    print("KERNEL_OK")
</pallas_src>

<mosaic_0001>
module attributes {stable_mosaic.version = 11 : i64} {
  func.func @_mlp_kernel(%arg0: i32, %arg1: memref<8x25xf32, #tpu.memory_space<vmem>>, %arg2: memref<25x128xf32, #tpu.memory_space<vmem>>, %arg3: memref<1x128xf32, #tpu.memory_space<vmem>>, %arg4: memref<128x25xf32, #tpu.memory_space<vmem>>, %arg5: memref<1x25xf32, #tpu.memory_space<vmem>>, %arg6: memref<8x25xf32, #tpu.memory_space<vmem>>) attributes {dimension_semantics = [#tpu.dimension_semantics<parallel>], iteration_bounds = array<i64: 1>, scalar_prefetch = 0 : i64, scratch_operands = 0 : i64, tpu.core_type = #tpu.core_type<tc>, window_params = [{transform_indices = @transform_0, window_bounds = array<i64: 8, 25>}, {pipeline_mode = #tpu.pipeline_mode<synchronous>, transform_indices = @transform_1, window_bounds = array<i64: 25, 128>}, {pipeline_mode = #tpu.pipeline_mode<synchronous>, transform_indices = @transform_2, window_bounds = array<i64: 1, 128>}, {pipeline_mode = #tpu.pipeline_mode<synchronous>, transform_indices = @transform_3, window_bounds = array<i64: 128, 25>}, {pipeline_mode = #tpu.pipeline_mode<synchronous>, transform_indices = @transform_4, window_bounds = array<i64: 1, 25>}, {transform_indices = @transform_5, window_bounds = array<i64: 8, 25>}]} {
    %c0 = arith.constant 0 : index
    %c0_0 = arith.constant 0 : index
    %0 = vector.load %arg1[%c0, %c0_0] : memref<8x25xf32, #tpu.memory_space<vmem>>, vector<8x25xf32>
    %c0_1 = arith.constant 0 : index
    %c0_2 = arith.constant 0 : index
    %1 = vector.load %arg2[%c0_1, %c0_2] : memref<25x128xf32, #tpu.memory_space<vmem>>, vector<25x128xf32>
    %cst = arith.constant dense<0.000000e+00> : vector<8x128xf32>
    %2 = tpu.matmul %0, %1, %cst {dimension_numbers = #tpu.dot_dimension_numbers<[1], [0], [0], [1], [0, 0, 1, 1], [], []>} : vector<8x25xf32>, vector<25x128xf32>, vector<8x128xf32> -> vector<8x128xf32>
    %c0_3 = arith.constant 0 : index
    %c0_4 = arith.constant 0 : index
    %3 = vector.load %arg3[%c0_3, %c0_4] : memref<1x128xf32, #tpu.memory_space<vmem>>, vector<1x128xf32>
    %4 = vector.broadcast %3 : vector<1x128xf32> to vector<8x128xf32>
    %5 = arith.addf %2, %4 : vector<8x128xf32>
    %6 = math.tanh %5 : vector<8x128xf32>
    %c0_5 = arith.constant 0 : index
    %c0_6 = arith.constant 0 : index
    %7 = vector.load %arg4[%c0_5, %c0_6] : memref<128x25xf32, #tpu.memory_space<vmem>>, vector<128x25xf32>
    %cst_7 = arith.constant dense<0.000000e+00> : vector<8x25xf32>
    %8 = tpu.matmul %6, %7, %cst_7 {dimension_numbers = #tpu.dot_dimension_numbers<[1], [0], [0], [1], [0, 0, 1, 1], [], []>} : vector<8x128xf32>, vector<128x25xf32>, vector<8x25xf32> -> vector<8x25xf32>
    %c0_8 = arith.constant 0 : index
    %c0_9 = arith.constant 0 : index
    %9 = vector.load %arg5[%c0_8, %c0_9] : memref<1x25xf32, #tpu.memory_space<vmem>>, vector<1x25xf32>
    %10 = vector.broadcast %9 : vector<1x25xf32> to vector<8x25xf32>
    %11 = arith.addf %8, %10 : vector<8x25xf32>
    %12 = math.tanh %11 : vector<8x25xf32>
    %c0_10 = arith.constant 0 : index
    %c0_11 = arith.constant 0 : index
    %13 = vector.load %arg6[%c0_10, %c0_11] : memref<8x25xf32, #tpu.memory_space<vmem>>, vector<8x25xf32>
    tpu.vector_store %arg6[%c0_10, %c0_11], %12 {strides = array<i32>} : memref<8x25xf32, #tpu.memory_space<vmem>>, vector<8x25xf32>,
    return
  }
  func.func @transform_0(%arg0: i32) -> (i32, i32) {
    %c0_i32 = arith.constant 0 : i32
    %c0_i32_0 = arith.constant 0 : i32
    return %arg0, %c0_i32 : i32, i32
  }
  func.func @transform_1(%arg0: i32) -> (i32, i32) {
    %c0_i32 = arith.constant 0 : i32
    %c0_i32_0 = arith.constant 0 : i32
    %c0_i32_1 = arith.constant 0 : i32
    return %c0_i32, %c0_i32_0 : i32, i32
  }
  func.func @transform_2(%arg0: i32) -> (i32, i32) {
    %c0_i32 = arith.constant 0 : i32
    %c0_i32_0 = arith.constant 0 : i32
    %c0_i32_1 = arith.constant 0 : i32
    return %c0_i32, %c0_i32_0 : i32, i32
  }
  func.func @transform_3(%arg0: i32) -> (i32, i32) {
    %c0_i32 = arith.constant 0 : i32
    %c0_i32_0 = arith.constant 0 : i32
    %c0_i32_1 = arith.constant 0 : i32
    return %c0_i32, %c0_i32_0 : i32, i32
  }
  func.func @transform_4(%arg0: i32) -> (i32, i32) {
    %c0_i32 = arith.constant 0 : i32
    %c0_i32_0 = arith.constant 0 : i32
    %c0_i32_1 = arith.constant 0 : i32
    return %c0_i32, %c0_i32_0 : i32, i32
  }
  func.func @transform_5(%arg0: i32) -> (i32, i32) {
    %c0_i32 = arith.constant 0 : i32
    %c0_i32_0 = arith.constant 0 : i32
    return %arg0, %c0_i32 : i32, i32
  }
}

</mosaic_0001>

<llo_original>
// kernel: net_forward.1
$region0: #{net_forward.1}
  #allocation0 [shape = 'u32[]', space=smem, size = 0x4, offset = 0x4, fixed_abs, tag = 'smem constant byte address 0x4 - core index']
  #allocation1 [shape = 'u32[144,128]{1,0:T(1,128)}', space=vmem, size = 0x12000, scoped, tag = 'internal scratch']
  %s0 = inlined_call_operand.vmem [shape: f32[8,25], index: 0, kind: input, shape index: {}]
  %s1 = inlined_call_operand.vmem [shape: f32[25,128], index: 1, kind: input, shape index: {}]
  %s2 = inlined_call_operand.vmem [shape: f32[1,128], index: 2, kind: input, shape index: {}]
  %s3 = inlined_call_operand.vmem [shape: f32[128,25], index: 3, kind: input, shape index: {}]
  %s4 = inlined_call_operand.vmem [shape: f32[1,25], index: 4, kind: input, shape index: {}]
  %s5 = inlined_call_operand.hbm [shape: f32[8,25], index: 5, kind: output, shape index: {}]
  %s6 = sld [smem:[#allocation0]]
  $region30: #{net_forward.1} parent=0
    _
  %s8 = ssub.s32 1, %s6
  %s9 = scalar_select 0, %s8, %s6
  $region1: #{net_forward.1} parent=0
    #allocation2 [shape = 'u8[4096]{0}', space=vmem, size = 0x1000, scoped, tag = 'output window, operand 0, single buffered']
    #allocation3 [shape = 's32[1]{0}', space=sflag, size = 0x4, scoped, tag = 'scoped memory for net_forward.1']
    %10 = vsyncpa [#allocation3], 0
    // Predicated region
    $region2: #{net_forward.1} parent=1 // pred_check
      _
    $region3: #{net_forward.1} parent=1 // pred_check_branch
      %12 = sbr.rel (0) target = $region5
    $region4: #{net_forward.1} parent=1 // pred_region
      _
    $region5: #{net_forward.1} parent=1 // pred_fallthru
      _
    // Predicated region
    $region6: #{net_forward.1} parent=1 // pred_check
      _
    $region7: #{net_forward.1} parent=1 // pred_check_branch
      %14 = sbr.rel (0) target = $region9
    $region8: #{net_forward.1} parent=1 // pred_region
      _
    $region9: #{net_forward.1} parent=1 // pred_fallthru
      _
    // Predicated region
    $region10: #{net_forward.1} parent=1 // pred_check
      _
    $region11: #{net_forward.1} parent=1 // pred_check_branch
      %16 = sbr.rel (0) target = $region13
    $region12: #{net_forward.1} parent=1 // pred_region
      _
    $region13: #{net_forward.1} parent=1 // pred_fallthru
      _
    // Predicated region
    $region14: #{net_forward.1} parent=1 // pred_check
      _
    $region15: #{net_forward.1} parent=1 // pred_check_branch
      %18 = sbr.rel (0) target = $region17
    $region16: #{net_forward.1} parent=1 // pred_region
      _
    $region17: #{net_forward.1} parent=1 // pred_fallthru
      _
    // Predicated region
    $region18: #{net_forward.1} parent=1 // pred_check
      _
    $region19: #{net_forward.1} parent=1 // pred_check_branch
      %20 = sbr.rel (0) target = $region21
    $region20: #{net_forward.1} parent=1 // pred_region
      _
    $region21: #{net_forward.1} parent=1 // pred_fallthru
      _
    %v21 = vld [vmem:[%s0] sm:$0xff]
    %v22 = vld [vmem:[%s1] sm:$0xff]
    %v23 = vld [vmem:[%s1 + $0x8] sm:$0xff]
    %v24 = vld [vmem:[%s1 + $0x10] sm:$0xff]
    %v25 = vld [vmem:[%s1 + $0x18] sm:$0x1]
    %v26 = vld [vmem:[%s2] sm:$0x1]
    %v28 = vlaneseq
    %v29 = vshrl.u32 %v28, 7
    %v30 = vsub.s32 0, %v29
    %v31 = vrot.slane %v26, %v30
    %vm33 = vcmask 203776
    %v35 = vsel %vm33, %v21, 0
    %vm37 = vcmask 1040384
    %v39 = vsel %vm37, %v25, 0
    %41 = vmatprep.subr.mxu0 0.0
    %42 = vmatpush1.msra.mxu0 0.0
    %43 = vmatprep.subr.mxu0 0.0
    %44 = vmatpush1.msra.mxu0 0.0
    %45 = vmatprep.subr.mxu0 0.0
    %46 = vmatpush1.msra.mxu0 0.0
    %47 = vmatprep.subr.mxu0 0.0
    %48 = vmatpush1.msra.mxu0 0.0
    %49 = vmatprep.subr.mxu0 0.0
    %50 = vmatpush1.msra.mxu0 0.0
    %51 = vmatprep.subr.mxu0 0.0
    %52 = vmatpush1.msra.mxu0 0.0
    %53 = vmatprep.subr.mxu0 0.0
    %54 = vmatpush1.msra.mxu0 0.0
    %55 = vmatprep.subr.mxu0 0.0
    %56 = vmatpush1.msra.mxu0 0.0
    %57 = vmatprep.subr.mxu0 0.0
    %58 = vmatpush1.msra.mxu0 0.0
    %59 = vmatprep.subr.mxu0 0.0
    %60 = vmatpush1.msra.mxu0 0.0
    %61 = vmatprep.subr.mxu0 0.0
    %62 = vmatpush1.msra.mxu0 0.0
    %63 = vmatprep.subr.mxu0 0.0
    %64 = vmatpush1.msra.mxu0 0.0
    %65 = vmatprep.subr.mxu0 0.0
    %66 = vmatpush1.msra.mxu0 %v39
    %67 = vmatprep.subr.mxu0 0.0
    %68 = vmatpush1.msra.mxu0 %v24
    %69 = vmatprep.subr.mxu0 0.0
    %70 = vmatpush1.msra.mxu0 %v23
    %71 = vmatprep.subr.mxu0 0.0
    %72 = vmatpush1.msra.mxu0 %v22
    %73 = vmatprep.subr.mxu0 0.0
    %74 = vmatpush2.msra.mxu0 0.0
    %75 = vmatprep.subr.mxu0 0.0
    %76 = vmatpush2.msra.mxu0 0.0
    %77 = vmatprep.subr.mxu0 0.0
    %78 = vmatpush2.msra.mxu0 0.0
    %79 = vmatprep.subr.mxu0 0.0
    %80 = vmatpush2.msra.mxu0 0.0
    %81 = vmatprep.subr.mxu0 0.0
    %82 = vmatpush2.msra.mxu0 0.0
    %83 = vmatprep.subr.mxu0 0.0
    %84 = vmatpush2.msra.mxu0 0.0
    %85 = vmatprep.subr.mxu0 0.0
    %86 = vmatpush2.msra.mxu0 0.0
    %87 = vmatprep.subr.mxu0 0.0
    %88 = vmatpush2.msra.mxu0 0.0
    %89 = vmatprep.subr.mxu0 0.0
    %90 = vmatpush2.msra.mxu0 0.0
    %91 = vmatprep.subr.mxu0 0.0
    %92 = vmatpush2.msra.mxu0 0.0
    %93 = vmatprep.subr.mxu0 0.0
    %94 = vmatpush2.msra.mxu0 0.0
    %95 = vmatprep.subr.mxu0 0.0
    %96 = vmatpush2.msra.mxu0 0.0
    %97 = vmatprep.subr.mxu0 0.0
    %98 = vmatpush2.msra.mxu0 0.0
    %99 = vmatprep.subr.mxu0 0.0
    %100 = vmatpush2.msra.mxu0 0.0
    %101 = vmatprep.subr.mxu0 0.0
    %102 = vmatpush2.msra.mxu0 0.0
    %103 = vmatprep.subr.mxu0 0.0
    %104 = vmatpush2.msra.mxu0 0.0
    %105 = vmatprep.mubr.f32.mxu0 0.0
    %106 = vmatmul.mubr.f32.gmra.mxu0 %v35
    %v107 = vpop.f32.mrf.mxu0
    %v108 = vadd.f32 %v31, %v107
    %v109 = vpop.f32.mrf.mxu0
    %110 = vdwg.mxu0
    %v111 = vtanh.pop %v108
    %v112 = vld [vmem:[%s3] sm:$0xff]
    %v113 = vld [vmem:[%s3 + $0x8] sm:$0xff]
    %v114 = vld [vmem:[%s3 + $0x10] sm:$0xff]
    %v115 = vld [vmem:[%s3 + $0x18] sm:$0xff]
    %v116 = vld [vmem:[%s3 + $0x20] sm:$0xff]
    %v117 = vld [vmem:[%s3 + $0x28] sm:$0xff]
    %v118 = vld [vmem:[%s3 + $0x30] sm:$0xff]
    %v119 = vld [vmem:[%s3 + $0x38] sm:$0xff]
    %v120 = vld [vmem:[%s3 + $0x40] sm:$0xff]
    %v121 = vld [vmem:[%s3 + $0x48] sm:$0xff]
    %v122 = vld [vmem:[%s3 + $0x50] sm:$0xff]
    %v123 = vld [vmem:[%s3 + $0x58] sm:$0xff]
    %v124 = vld [vmem:[%s3 + $0x60] sm:$0xff]
    %v125 = vld [vmem:[%s3 + $0x68] sm:$0xff]
    %v126 = vld [vmem:[%s3 + $0x70] sm:$0xff]
    %v127 = vld [vmem:[%s3 + $0x78] sm:$0xff]
    %v128 = vld [vmem:[%s4] sm:$0x1]
    %v130 = vlaneseq
    %v131 = vshrl.u32 %v130, 7
    %v132 = vsub.s32 0, %v131
    %v133 = vrot.slane %v128, %v132
    %135 = vmatprep.subr.mxu0 0.0
    %136 = vmatpush1.msra.mxu0 %v127
    %137 = vmatprep.subr.mxu0 0.0
    %138 = vmatpush1.msra.mxu0 %v126
    %139 = vmatprep.subr.mxu0 0.0
    %140 = vmatpush1.msra.mxu0 %v125
    %141 = vmatprep.subr.mxu0 0.0
    %142 = vmatpush1.msra.mxu0 %v124
    %143 = vmatprep.subr.mxu0 0.0
    %144 = vmatpush1.msra.mxu0 %v123
    %145 = vmatprep.subr.mxu0 0.0
    %146 = vmatpush1.msra.mxu0 %v122
    %147 = vmatprep.subr.mxu0 0.0
    %148 = vmatpush1.msra.mxu0 %v121
    %149 = vmatprep.subr.mxu0 0.0
    %150 = vmatpush1.msra.mxu0 %v120
    %151 = vmatprep.subr.mxu0 0.0
    %152 = vmatpush1.msra.mxu0 %v119
    %153 = vmatprep.subr.mxu0 0.0
    %154 = vmatpush1.msra.mxu0 %v118
    %155 = vmatprep.subr.mxu0 0.0
    %156 = vmatpush1.msra.mxu0 %v117
    %157 = vmatprep.subr.mxu0 0.0
    %158 = vmatpush1.msra.mxu0 %v116
    %159 = vmatprep.subr.mxu0 0.0
    %160 = vmatpush1.msra.mxu0 %v115
    %161 = vmatprep.subr.mxu0 0.0
    %162 = vmatpush1.msra.mxu0 %v114
    %163 = vmatprep.subr.mxu0 0.0
    %164 = vmatpush1.msra.mxu0 %v113
    %165 = vmatprep.subr.mxu0 0.0
    %166 = vmatpush1.msra.mxu0 %v112
    %167 = vmatprep.subr.mxu0 0.0
    %168 = vmatpush2.msra.mxu0 0.0
    %169 = vmatprep.subr.mxu0 0.0
    %170 = vmatpush2.msra.mxu0 0.0
    %171 = vmatprep.subr.mxu0 0.0
    %172 = vmatpush2.msra.mxu0 0.0
    %173 = vmatprep.subr.mxu0 0.0
    %174 = vmatpush2.msra.mxu0 0.0
    %175 = vmatprep.subr.mxu0 0.0
    %176 = vmatpush2.msra.mxu0 0.0
    %177 = vmatprep.subr.mxu0 0.0
    %178 = vmatpush2.msra.mxu0 0.0
    %179 = vmatprep.subr.mxu0 0.0
    %180 = vmatpush2.msra.mxu0 0.0
    %181 = vmatprep.subr.mxu0 0.0
    %182 = vmatpush2.msra.mxu0 0.0
    %183 = vmatprep.subr.mxu0 0.0
    %184 = vmatpush2.msra.mxu0 0.0
    %185 = vmatprep.subr.mxu0 0.0
    %186 = vmatpush2.msra.mxu0 0.0
    %187 = vmatprep.subr.mxu0 0.0
    %188 = vmatpush2.msra.mxu0 0.0
    %189 = vmatprep.subr.mxu0 0.0
    %190 = vmatpush2.msra.mxu0 0.0
    %191 = vmatprep.subr.mxu0 0.0
    %192 = vmatpush2.msra.mxu0 0.0
    %193 = vmatprep.subr.mxu0 0.0
    %194 = vmatpush2.msra.mxu0 0.0
    %195 = vmatprep.subr.mxu0 0.0
    %196 = vmatpush2.msra.mxu0 0.0
    %197 = vmatprep.subr.mxu0 0.0
    %198 = vmatpush2.msra.mxu0 0.0
    %199 = vmatprep.mubr.f32.mxu0 0.0
    %200 = vmatmul.mubr.f32.gmra.mxu0 %v111
    %v201 = vpop.f32.mrf.mxu0
    %v202 = vadd.f32 %v133, %v201
    %v203 = vpop.f32.mrf.mxu0
    %204 = vdwg.mxu0
    %v205 = vtanh.pop %v202
    %206 = vst.msk [vmem:[#allocation2] sm:$0xff] %vm33, %v205
    // Predicated region
    $region22: #{net_forward.1} parent=1 // pred_check
      _
    $region23: #{net_forward.1} parent=1 // pred_check_branch
      %208 = sbr.rel (0) target = $region25
    $region24: #{net_forward.1} parent=1 // pred_region
      %s210 = ssub.s32 128, 128
      %211 = vsyncadd [#allocation3], %s210
      %s213 = sshll.u32 [#allocation2], 4
      %s214 = int_to_ptr.vmem [resolvable:$true] %s213
      %216 = dma.vmem_to_hbm [thread:$0]  %s214, 128, %s5, [#allocation3]
    $region25: #{net_forward.1} parent=1 // pred_fallthru
      _
    // Predicated region
    $region26: #{net_forward.1} parent=1 // pred_check
      _
    $region27: #{net_forward.1} parent=1 // pred_check_branch
      %218 = sbr.rel (0) target = $region29
    $region28: #{net_forward.1} parent=1 // pred_region
      %219 = dma.done [#allocation3], 128
    $region29: #{net_forward.1} parent=1 // pred_fallthru
      _
    %220 = vsyncpa [#allocation3], 1

</llo_original>
